<compile_context>
chip_gen: v7x
topology: tpu7x:2x2x1
jax: 0.10.0
libtpu: 0.0.40
codegen_flags: <defaults>
</compile_context>

<pallas_src>
import functools
import math

import jax
import jax.numpy as jnp
from jax.experimental import pallas as pl
from jax.experimental.pallas import tpu as pltpu


def _round_up(x, m):
    return ((x + m - 1) // m) * m


def _rope_kernel(scale_ref, off_ref, cos_ref, sin_ref, *, k, duplicate):
    # scale_ref / off_ref: (1, W) f32 resident rows (same block every grid step).
    #   scale_ref[l] = inv_freq_pattern[channel(l)]
    #   off_ref[l]   = fold offset (l // dim) for the folded path, 0 for halved.
    # cos_ref / sin_ref: (tile_r, 2*W) if duplicate (halved path) else (tile_r, W).
    #
    # Position of (row r, lane l) is t = (base + r)*k + off[l], an exact f32
    # integer, so arg = t * scale matches the reference rounding exactly.
    tile_r = cos_ref.shape[0]
    w = scale_ref.shape[1]

    base_k = (pl.program_id(0) * (tile_r * k)).astype(jnp.float32)   # scalar, exact
    row = jax.lax.broadcasted_iota(jnp.int32, (tile_r, w), 0)
    rowk = (row * k).astype(jnp.float32)                              # exact ints
    t = rowk + (base_k + off_ref[...])                                # exact ints
    arg = t * scale_ref[...]

    c = jnp.cos(arg).astype(cos_ref.dtype)
    s = jnp.sin(arg).astype(sin_ref.dtype)

    if duplicate:
        # dim % 256 == 0: compute on the half-width slab only (2x fewer sin/cos),
        # both lane-slice stores are 128-lane aligned (no masked vst).
        cos_ref[:, :w] = c
        cos_ref[:, w:] = c
        sin_ref[:, :w] = s
        sin_ref[:, w:] = s
    else:
        cos_ref[...] = c
        sin_ref[...] = s


def _build_cos_sin_cache_impl(inv_freq, seq_len, dim, out_dtype):
    """Cos/sin cache of shape (1, 1, seq_pad, dim) with seq_pad >= seq_len.

    Padded rows are cos/sin of valid positions seq_len..seq_pad-1, so the
    returned (padded) cache is correct for any seq_len' <= seq_pad.
    """
    half = dim // 2
    use_half = (dim % 256 == 0)

    if use_half:
        k = 1
        comp_w = half            # compute width
        out_w = dim              # output lane width (multiple of 256)
        scale_row = inv_freq.reshape(1, comp_w).astype(jnp.float32)
        off_row = jnp.zeros((1, comp_w), jnp.float32)
    else:
        # Fold k positions per output row so the lane width is a multiple of 128.
        k = 128 // math.gcd(dim, 128)
        comp_w = out_w = k * dim
        emb_freq = jnp.concatenate([inv_freq, inv_freq]).astype(jnp.float32)  # cat((f,f),-1)
        scale_row = jnp.tile(emb_freq, (k,)).reshape(1, out_w)                # [l % dim]
        off_row = jnp.repeat(
            jnp.arange(k, dtype=jnp.float32), dim).reshape(1, out_w)          # [l // dim]

    itemsize = jnp.dtype(out_dtype).itemsize
    rows = pl.cdiv(seq_len, k)                      # folded rows actually needed
    rows8 = _round_up(rows, 8)

    # ~1 MiB per output block (review: 256 KiB / 512-row tiles were step-overhead
    # bound); 2 outputs x 2 buffers x 1 MiB = 4 MiB + elementwise temporaries
    # stays well inside even v5e's 16 MiB default scoped VMEM.
    tile_r = (1 * 1024 * 1024) // (out_w * itemsize)
    tile_r = max(8, min(4096, (tile_r // 8) * 8))
    tile_r = min(tile_r, rows8)
    # Keep >= 2 grid steps when the cache allows it so v7x megacore can shard
    # the "parallel" axis across both TensorCores.
    if rows8 >= 16 and pl.cdiv(rows8, tile_r) < 2:
        tile_r = _round_up(pl.cdiv(rows8, 2), 8)
    grid_n = pl.cdiv(rows8, tile_r)
    rows_pad = grid_n * tile_r
    seq_pad = rows_pad * k

    kernel = functools.partial(_rope_kernel, k=k, duplicate=use_half)

    cost = pl.CostEstimate(
        flops=4 * rows_pad * comp_w,
        transcendentals=2 * rows_pad * comp_w,
        bytes_accessed=2 * rows_pad * out_w * itemsize + 2 * comp_w * 4,
    )

    cos2d, sin2d = pl.pallas_call(
        kernel,
        out_shape=(
            jax.ShapeDtypeStruct((rows_pad, out_w), out_dtype),
            jax.ShapeDtypeStruct((rows_pad, out_w), out_dtype),
        ),
        grid_spec=pltpu.PrefetchScalarGridSpec(
            num_scalar_prefetch=0,
            grid=(grid_n,),
            in_specs=[
                pl.BlockSpec((1, comp_w), lambda i: (0, 0)),
                pl.BlockSpec((1, comp_w), lambda i: (0, 0)),
            ],
            out_specs=[
                pl.BlockSpec((tile_r, out_w), lambda i: (i, 0)),
                pl.BlockSpec((tile_r, out_w), lambda i: (i, 0)),
            ],
        ),
        compiler_params=pltpu.CompilerParams(
            dimension_semantics=("parallel",),
            vmem_limit_bytes=32 * 1024 * 1024,
        ),
        cost_estimate=cost,
    )(scale_row, off_row)

    # Row-major reshape (a bitcast inside jit) undoes the fold; keep the padded
    # rows (valid positions) -> no post-kernel slice copy.
    cos = cos2d.reshape(seq_pad, dim)[None, None, :, :]
    sin = sin2d.reshape(seq_pad, dim)[None, None, :, :]
    return cos, sin


_build_cos_sin_cache = jax.jit(_build_cos_sin_cache_impl, static_argnums=(1, 2, 3))


class RotaryEmbedding:
    """JAX/Pallas port of the PyTorch RotaryEmbedding module."""

    def __init__(self, dim, max_position_embeddings=2048, base=10000,
                 cache_dtype=jnp.float32):
        self.dim = dim
        self.max_position_embeddings = max_position_embeddings
        self.base = base
        self.cache_dtype = jnp.dtype(cache_dtype)   # f32 keeps the torch contract
        # inv_freq = 1 / base ** (arange(0, dim, 2) / dim)  (same f32 pow as torch)
        self.inv_freq = 1.0 / (
            base ** (jnp.arange(0, dim, 2, dtype=jnp.float32) / dim)
        )
        self.cos_cached, self.sin_cached = _build_cos_sin_cache(
            self.inv_freq, max_position_embeddings, dim, self.cache_dtype
        )

    def __call__(self, x, seq_len=None):
        if seq_len is None:
            # PyTorch would raise on None; default to the sequence axis of x.
            seq_len = x.shape[-2]
        if seq_len > self.cos_cached.shape[2]:
            # TODO(synk): Python-level cache regrowth + state mutation is not
            # jit-traceable (same limitation as the torch original).
            self.cos_cached, self.sin_cached = _build_cos_sin_cache(
                self.inv_freq, seq_len, self.dim, self.cache_dtype
            )
        return (
            self.cos_cached[:, :, :seq_len, ...],
            self.sin_cached[:, :, :seq_len, ...],
        )


if __name__ == "__main__":
    key = jax.random.PRNGKey(0)

    # --- small-dim path (folded lane-dense kernel): dim=32 -> fold factor 4 ---
    batch, heads, seq_len, dim = 2, 1, 8, 32
    max_pos = 64
    x = jax.random.normal(key, (batch, heads, seq_len, dim), dtype=jnp.float32)

    rope = RotaryEmbedding(dim, max_position_embeddings=max_pos, base=10000)
    cos, sin = rope(x, seq_len=seq_len)
    cos = jax.block_until_ready(cos)
    sin = jax.block_until_ready(sin)

    t = jnp.arange(max_pos, dtype=jnp.float32)
    freqs = jnp.einsum("i,j->ij", t, rope.inv_freq)
    emb = jnp.concatenate([freqs, freqs], axis=-1)
    cos_ref = jnp.cos(emb)[None, None, :seq_len, :]
    sin_ref = jnp.sin(emb)[None, None, :seq_len, :]

    assert cos.shape == (1, 1, seq_len, dim), cos.shape
    assert sin.shape == (1, 1, seq_len, dim), sin.shape
    assert cos.dtype == jnp.float32 and sin.dtype == jnp.float32
    assert jnp.allclose(cos, cos_ref, atol=1e-5, rtol=1e-5)
    assert jnp.allclose(sin, sin_ref, atol=1e-5, rtol=1e-5)

    # --- large-dim path (halved-transcendental kernel): dim=256 ---
    dim2, max_pos2, seq2 = 256, 128, 16
    rope2 = RotaryEmbedding(dim2, max_position_embeddings=max_pos2, base=10000)
    x2 = jax.random.normal(key, (1, 1, seq2, dim2), dtype=jnp.float32)
    cos2, sin2 = rope2(x2, seq_len=seq2)
    cos2 = jax.block_until_ready(cos2)
    sin2 = jax.block_until_ready(sin2)

    t2 = jnp.arange(max_pos2, dtype=jnp.float32)
    f2 = jnp.einsum("i,j->ij", t2, rope2.inv_freq)
    e2 = jnp.concatenate([f2, f2], axis=-1)
    assert cos2.shape == (1, 1, seq2, dim2)
    assert jnp.allclose(cos2, jnp.cos(e2)[None, None, :seq2, :], atol=1e-5, rtol=1e-5)
    assert jnp.allclose(sin2, jnp.sin(e2)[None, None, :seq2, :], atol=1e-5, rtol=1e-5)

    # --- optional bf16 cache (halves writeback / VMEM); loose tolerance smoke ---
    rope3 = RotaryEmbedding(dim, max_position_embeddings=max_pos, base=10000,
                            cache_dtype=jnp.bfloat16)
    cos3, sin3 = rope3(x, seq_len=seq_len)
    cos3 = jax.block_until_ready(cos3)
    sin3 = jax.block_until_ready(sin3)
    assert cos3.dtype == jnp.bfloat16 and sin3.dtype == jnp.bfloat16
    assert jnp.allclose(cos3.astype(jnp.float32), cos_ref, atol=1e-2, rtol=1e-2)
    assert jnp.allclose(sin3.astype(jnp.float32), sin_ref, atol=1e-2, rtol=1e-2)

    print("KERNEL_OK")
</pallas_src>

<mosaic_0001>
module attributes {stable_mosaic.version = 11 : i64} {
  func.func @_rope_kernel(%arg0: i32, %arg1: memref<1x128xf32, #tpu.memory_space<vmem>>, %arg2: memref<1x128xf32, #tpu.memory_space<vmem>>, %arg3: memref<8x128xf32, #tpu.memory_space<vmem>>, %arg4: memref<8x128xf32, #tpu.memory_space<vmem>>) attributes {dimension_semantics = [#tpu.dimension_semantics<parallel>], iteration_bounds = array<i64: 2>, scalar_prefetch = 0 : i64, scratch_operands = 0 : i64, tpu.core_type = #tpu.core_type<tc>, window_params = [{pipeline_mode = #tpu.pipeline_mode<synchronous>, transform_indices = @transform_0, window_bounds = array<i64: 1, 128>}, {pipeline_mode = #tpu.pipeline_mode<synchronous>, transform_indices = @transform_1, window_bounds = array<i64: 1, 128>}, {transform_indices = @transform_2, window_bounds = array<i64: 8, 128>}, {transform_indices = @transform_3, window_bounds = array<i64: 8, 128>}]} {
    %c32_i32 = arith.constant 32 : i32
    %0 = arith.muli %arg0, %c32_i32 : i32
    %1 = arith.sitofp %0 : i32 to f32
    %2 = tpu.iota {dimensions = array<i32: 0>} : vector<8x128xi32>
    %c4_i32 = arith.constant 4 : i32
    %3 = vector.broadcast %c4_i32 : i32 to vector<8x128xi32>
    %4 = arith.muli %2, %3 : vector<8x128xi32>
    %5 = arith.sitofp %4 : vector<8x128xi32> to vector<8x128xf32>
    %c0 = arith.constant 0 : index
    %c0_0 = arith.constant 0 : index
    %6 = vector.load %arg2[%c0, %c0_0] : memref<1x128xf32, #tpu.memory_space<vmem>>, vector<1x128xf32>
    %7 = vector.broadcast %1 : f32 to vector<1x128xf32>
    %8 = arith.addf %7, %6 : vector<1x128xf32>
    %9 = vector.broadcast %8 : vector<1x128xf32> to vector<8x128xf32>
    %10 = arith.addf %5, %9 : vector<8x128xf32>
    %c0_1 = arith.constant 0 : index
    %c0_2 = arith.constant 0 : index
    %11 = vector.load %arg1[%c0_1, %c0_2] : memref<1x128xf32, #tpu.memory_space<vmem>>, vector<1x128xf32>
    %12 = vector.broadcast %11 : vector<1x128xf32> to vector<8x128xf32>
    %13 = arith.mulf %10, %12 : vector<8x128xf32>
    %14 = math.cos %13 : vector<8x128xf32>
    %15 = math.sin %13 : vector<8x128xf32>
    %c0_3 = arith.constant 0 : index
    %c0_4 = arith.constant 0 : index
    %16 = vector.load %arg3[%c0_3, %c0_4] : memref<8x128xf32, #tpu.memory_space<vmem>>, vector<8x128xf32>
    tpu.vector_store %arg3[%c0_3, %c0_4], %14 {strides = array<i32>} : memref<8x128xf32, #tpu.memory_space<vmem>>, vector<8x128xf32>,
    %c0_5 = arith.constant 0 : index
    %c0_6 = arith.constant 0 : index
    %17 = vector.load %arg4[%c0_5, %c0_6] : memref<8x128xf32, #tpu.memory_space<vmem>>, vector<8x128xf32>
    tpu.vector_store %arg4[%c0_5, %c0_6], %15 {strides = array<i32>} : memref<8x128xf32, #tpu.memory_space<vmem>>, vector<8x128xf32>,
    return
  }
  func.func @transform_0(%arg0: i32) -> (i32, i32) {
    %c0_i32 = arith.constant 0 : i32
    %c0_i32_0 = arith.constant 0 : i32
    %c0_i32_1 = arith.constant 0 : i32
    return %c0_i32, %c0_i32_0 : i32, i32
  }
  func.func @transform_1(%arg0: i32) -> (i32, i32) {
    %c0_i32 = arith.constant 0 : i32
    %c0_i32_0 = arith.constant 0 : i32
    %c0_i32_1 = arith.constant 0 : i32
    return %c0_i32, %c0_i32_0 : i32, i32
  }
  func.func @transform_2(%arg0: i32) -> (i32, i32) {
    %c0_i32 = arith.constant 0 : i32
    %c0_i32_0 = arith.constant 0 : i32
    return %arg0, %c0_i32 : i32, i32
  }
  func.func @transform_3(%arg0: i32) -> (i32, i32) {
    %c0_i32 = arith.constant 0 : i32
    %c0_i32_0 = arith.constant 0 : i32
    return %arg0, %c0_i32 : i32, i32
  }
}

</mosaic_0001>

<llo_original>
// kernel: tile.8
$region0: #{tile.8}
  #allocation0 [shape = 's32[1]{0}', space=sflag, size = 0x4, scoped, tag = 'scoped memory for tile.8']
  %s0 = inlined_call_operand.vmem [shape: f32[32], index: 0, kind: input, shape index: {}]
  %s1 = inlined_call_operand.vmem [shape: f32[4,32], index: 1, kind: output, shape index: {}]
  // Predicated region
  $region2: #{tile.8} parent=0 // pred_check
    _
  $region3: #{tile.8} parent=0 // pred_check_branch
    %3 = sbr.rel (0) target = $region5
  $region4: #{tile.8} parent=0 // pred_region
    _
  $region5: #{tile.8} parent=0 // pred_fallthru
    _
  %v4 = vld [vmem:[%s0] ss:$0 sm:$0xff]
  %5 = vst [vmem:[%s1] sm:$0xf] %v4

// kernel: tile.9
$region0: #{tile.9}
  %s0 = inlined_call_operand.vmem [shape: f32[4,32], index: 0, kind: input, shape index: {}]
  %s1 = inlined_call_operand.vmem [shape: f32[1,128], index: 1, kind: output, shape index: {}]
  $region1: #{tile.9} parent=0
    #allocation0 [shape = 'u8[4096]{0}', space=vmem, size = 0x1000, scoped, tag = 'scoped mem for output reshape']
    #allocation1 [shape = 'u8[4096]{0}', space=vmem, size = 0x1000, scoped, tag = 'scoped mem for input reshape']
    %s3 = sshllo.u32 0, 4
    %v4 = vld [vmem:[%s0] sm:%s3]
    %5 = vst [vmem:[#allocation1] sm:%s3] %v4
    %v6 = vld [vmem:[#allocation1] sm:$0x1]
    %vm7 = vcmask 261120
    %8 = vst.msk [vmem:[#allocation0] sm:$0x1] %vm7, %v6
    %s9 = scalar_lea.vmem [#allocation1], 3
    %v10 = vld [vmem:[%s9] sm:$0x1]
    %11 = vrot.lane.b32.xlu0 %v10, 96
    %v12 = vpop.permute.xlu0 %11
    %vm13 = vcmask 1048320
    %14 = vst.msk [vmem:[#allocation0] sm:$0x1] %vm13, %v12
    %s15 = scalar_lea.vmem [#allocation1], 2
    %v16 = vld [vmem:[%s15] sm:$0x1]
    %17 = vrot.lane.b32.xlu0 %v16, 64
    %v18 = vpop.permute.xlu0 %17
    %vm19 = vcmask 785920
    %20 = vst.msk [vmem:[#allocation0] sm:$0x1] %vm19, %v18
    %s21 = scalar_lea.vmem [#allocation1], 1
    %v22 = vld [vmem:[%s21] sm:$0x1]
    %23 = vrot.lane.b32.xlu0 %v22, 32
    %v24 = vpop.permute.xlu0 %23
    %vm25 = vcmask 523520
    %26 = vst.msk [vmem:[#allocation0] sm:$0x1] %vm25, %v24
    %s28 = sshllo.u32 0, 1
    %v30 = vld [vmem:[#allocation0] sm:%s28]
    %s31 = sshllo.u32 0, 1
    %32 = vst [vmem:[%s1] sm:%s31] %v30

// kernel: _build_cos_sin_cache_impl.1
$region0: #{_build_cos_sin_cache_impl.1}
  #allocation0 [shape = 'u32[]', space=smem, size = 0x4, offset = 0x4, fixed_abs, tag = 'smem constant byte address 0x4 - core index']
  #allocation1 [shape = 'u32[144,128]{1,0:T(1,128)}', space=vmem, size = 0x12000, scoped, tag = 'internal scratch']
  %s0 = inlined_call_operand.vmem [shape: f32[1,128], index: 0, kind: input, shape index: {}]
  %s1 = inlined_call_operand.vmem [shape: f32[1,128], index: 1, kind: input, shape index: {}]
  %s2 = inlined_call_operand.vmem [shape: f32[16,128], index: 2, kind: output, shape index: {0}]
  %s3 = inlined_call_operand.vmem [shape: f32[16,128], index: 3, kind: output, shape index: {1}]
  %4 = xla_tuple %s2, %s3
  %s5 = sld [smem:[#allocation0]]
  $region49: #{_build_cos_sin_cache_impl.1} parent=0
    _
  %s7 = ssub.s32 1, %s5
  %s8 = scalar_select 0, %s7, %s5
  loop: start=0, step=1, limit=4
  $region2: #{_build_cos_sin_cache_impl.1} parent=0 // loop_pre_header
    _
  $region3: #{_build_cos_sin_cache_impl.1} parent=0 // loop_header
    %s10 = sphi 0, %s14
    %p11 = scmp.ge.s32.totalorder %s10, 4
    %s18 = sphi 0, %s18
    %s20 = sphi 0, %s18
    %s21 = sphi 0, %s20
    %s35 = sphi 0, %s21
    %s39 = sphi 0, %s39
    %s41 = sphi 0, %s39
    %s42 = sphi 0, %s41
    %s56 = sphi 0, %s42
    %s62 = sphi 0, %s64
    %s65 = sphi 0, %s62
    %s66 = sphi 0, %s65
    %s82 = sphi 0, %s66
    %s88 = sphi 0, %s90
    %s91 = sphi 0, %s88
    %s92 = sphi 0, %s91
    %s108 = sphi 0, %s92
  $region4: #{_build_cos_sin_cache_impl.1} parent=0 // loop_header_branch
    %13 = sbr.rel (%p11) target = $region8
  $region5: #{_build_cos_sin_cache_impl.1} parent=0 // loop_body
    %s15 = ssub.s32 %s10, 1
    %s16 = ssub.s32 %s10, 2
    %s17 = sadd.s32 %s10, 1
    %s19 = sadd.s32 %s18, 1
    %p22 = scmp.eq.s32.totalorder %s10, 1
    %p23 = scmp.ne.s32.totalorder %s18, %s20
    %p24 = scmp.eq.s32.totalorder %s10, 0
    %p25 = por %p23, %p24
    %p26 = scmp.ne.s32.totalorder %s18, %s20
    %p27 = scmp.eq.s32.totalorder %s15, 1
    %p28 = por %p26, %p27
    %p29 = scmp.ne.s32.totalorder %s20, %s21
    %p30 = scmp.eq.s32.totalorder %s15, 0
    %p31 = por %p29, %p30
    %p32 = scmp.ne.s32.totalorder %s20, %s21
    %p33 = scmp.eq.s32.totalorder %s16, 1
    %p34 = por %p32, %p33
    %p36 = scmp.ne.s32.totalorder %s21, %s35
    %p37 = scmp.eq.s32.totalorder %s16, 0
    %p38 = por %p36, %p37
    %s40 = sadd.s32 %s39, 1
    %p43 = scmp.eq.s32.totalorder %s10, 1
    %p44 = scmp.ne.s32.totalorder %s39, %s41
    %p45 = scmp.eq.s32.totalorder %s10, 0
    %p46 = por %p44, %p45
    %p47 = scmp.ne.s32.totalorder %s39, %s41
    %p48 = scmp.eq.s32.totalorder %s15, 1
    %p49 = por %p47, %p48
    %p50 = scmp.ne.s32.totalorder %s41, %s42
    %p51 = scmp.eq.s32.totalorder %s15, 0
    %p52 = por %p50, %p51
    %p53 = scmp.ne.s32.totalorder %s41, %s42
    %p54 = scmp.eq.s32.totalorder %s16, 1
    %p55 = por %p53, %p54
    %p57 = scmp.ne.s32.totalorder %s42, %s56
    %p58 = scmp.eq.s32.totalorder %s16, 0
    %p59 = por %p57, %p58
    %s60 = ssub.s32 %s10, %s17
    %p61 = scmp.eq.s32.totalorder %s60, 0
    %s63 = sadd.s32 %s62, 1
    %s64 = scalar_select %p61, %s62, %s63
    %p67 = pneg %p61
    %p68 = scmp.eq.s32.totalorder %s10, 1
    %p69 = por %p67, %p68
    %p70 = scmp.ne.s32.totalorder %s62, %s65
    %p71 = scmp.eq.s32.totalorder %s10, 0
    %p72 = por %p70, %p71
    %p73 = scmp.ne.s32.totalorder %s62, %s65
    %p74 = scmp.eq.s32.totalorder %s15, 1
    %p75 = por %p73, %p74
    %p76 = scmp.ne.s32.totalorder %s65, %s66
    %p77 = scmp.eq.s32.totalorder %s15, 0
    %p78 = por %p76, %p77
    %p79 = scmp.ne.s32.totalorder %s65, %s66
    %p80 = scmp.eq.s32.totalorder %s16, 1
    %p81 = por %p79, %p80
    %p83 = scmp.ne.s32.totalorder %s66, %s82
    %p84 = scmp.eq.s32.totalorder %s16, 0
    %p85 = por %p83, %p84
    %s86 = ssub.s32 %s10, %s17
    %p87 = scmp.eq.s32.totalorder %s86, 0
    %s89 = sadd.s32 %s88, 1
    %s90 = scalar_select %p87, %s88, %s89
    %p93 = pneg %p87
    %p94 = scmp.eq.s32.totalorder %s10, 1
    %p95 = por %p93, %p94
    %p96 = scmp.ne.s32.totalorder %s88, %s91
    %p97 = scmp.eq.s32.totalorder %s10, 0
    %p98 = por %p96, %p97
    %p99 = scmp.ne.s32.totalorder %s88, %s91
    %p100 = scmp.eq.s32.totalorder %s15, 1
    %p101 = por %p99, %p100
    %p102 = scmp.ne.s32.totalorder %s91, %s92
    %p103 = scmp.eq.s32.totalorder %s15, 0
    %p104 = por %p102, %p103
    %p105 = scmp.ne.s32.totalorder %s91, %s92
    %p106 = scmp.eq.s32.totalorder %s16, 1
    %p107 = por %p105, %p106
    %p109 = scmp.ne.s32.totalorder %s92, %s108
    %p110 = scmp.eq.s32.totalorder %s16, 0
    %p111 = por %p109, %p110
    %p112 = scmp.le.s32.totalorder 1, %s10
    %p113 = scmp.lt.s32.totalorder %s10, 3
    %p114 = pnand %p112, %p113
    %p115 = pneg %p114
    // Predicated region
    $region9: #{_build_cos_sin_cache_impl.1} parent=5 // pred_check
      _
    $region10: #{_build_cos_sin_cache_impl.1} parent=5 // pred_check_branch
      %117 = sbr.rel (%p114) target = $region12
    $region11: #{_build_cos_sin_cache_impl.1} parent=5 // pred_region
      %s118 = ssub.s32 %s10, 1
      // Predicated region
      $region13: #{_build_cos_sin_cache_impl.1} parent=11 // pred_check
        %p119 = pneg %p31
      $region14: #{_build_cos_sin_cache_impl.1} parent=11 // pred_check_branch
        %121 = sbr.rel (%p119) target = $region16
      $region15: #{_build_cos_sin_cache_impl.1} parent=11 // pred_region
        _
      $region16: #{_build_cos_sin_cache_impl.1} parent=11 // pred_fallthru
        _
      // Predicated region
      $region17: #{_build_cos_sin_cache_impl.1} parent=11 // pred_check
        %p122 = pneg %p52
      $region18: #{_build_cos_sin_cache_impl.1} parent=11 // pred_check_branch
        %124 = sbr.rel (%p122) target = $region20
      $region19: #{_build_cos_sin_cache_impl.1} parent=11 // pred_region
        _
      $region20: #{_build_cos_sin_cache_impl.1} parent=11 // pred_fallthru
        _
    $region12: #{_build_cos_sin_cache_impl.1} parent=5 // pred_fallthru
      _
    %p125 = scmp.lt.s32.totalorder %s10, 2
    // Predicated region
    $region21: #{_build_cos_sin_cache_impl.1} parent=5 // pred_check
      %p126 = pneg %p125
    $region22: #{_build_cos_sin_cache_impl.1} parent=5 // pred_check_branch
      %128 = sbr.rel (%p126) target = $region24
    $region23: #{_build_cos_sin_cache_impl.1} parent=5 // pred_region
      _
    $region24: #{_build_cos_sin_cache_impl.1} parent=5 // pred_fallthru
      _
    %p129 = scmp.le.s32.totalorder 1, %s10
    %p130 = scmp.lt.s32.totalorder %s10, 3
    %p131 = pnand %p129, %p130
    %p132 = pneg %p131
    // Predicated region
    $region25: #{_build_cos_sin_cache_impl.1} parent=5 // pred_check
      _
    $region26: #{_build_cos_sin_cache_impl.1} parent=5 // pred_check_branch
      %134 = sbr.rel (%p131) target = $region28
    $region27: #{_build_cos_sin_cache_impl.1} parent=5 // pred_region
      %s135 = ssub.s32 %s10, 1
      %p136 = pneg %p31
      %p137 = pneg %p28
      %p138 = pneg %p52
      %p139 = pneg %p49
      %p140 = pneg %p78
      %p141 = pneg %p75
      %p142 = scmp.lt.s32.totalorder %s15, 1
      %s143 = scalar_select %p142, %s15, 1
      %s144 = smul.addr %s143, 8
      %s145 = scalar_lea.vmem %s2, %s144
      %p146 = pneg %p104
      %p147 = pneg %p101
      %p148 = scmp.lt.s32.totalorder %s15, 1
      %s149 = scalar_select %p148, %s15, 1
      %s150 = smul.addr %s149, 8
      %s151 = scalar_lea.vmem %s3, %s150
      %p152 = scmp.lt.s32.totalorder %s15, 1
      %s153 = scalar_select %p152, %s15, 1
      %s154 = smul.addr %s153, 8
      %s155 = scalar_lea.vmem %s2, %s154
      %p156 = scmp.lt.s32.totalorder %s15, 1
      %s157 = scalar_select %p156, %s15, 1
      %s158 = smul.addr %s157, 8
      %s159 = scalar_lea.vmem %s3, %s158
      %s160 = smul.u32 %s15, 32
      %s161 = scvt.s32.f32 %s160
      %v162 = vlaneseq
      %v163 = vshrl.u32 %v162, 7
      %v164 = vmul.u32 %v163, 4
      %v165 = vcvt.s32.f32 %v164
      %v166 = vld [vmem:[%s1] sm:$0x1]
      %v167 = vstv %s161
      %v168 = vadd.f32 %v167, %v166
      %v170 = vlaneseq
      %v171 = vshrl.u32 %v170, 7
      %v172 = vsub.s32 0, %v171
      %v173 = vrot.slane %v168, %v172
      %v175 = vadd.f32 %v165, %v173
      %v176 = vld [vmem:[%s0] sm:$0x1]
      %v178 = vlaneseq
      %v179 = vshrl.u32 %v178, 7
      %v180 = vsub.s32 0, %v179
      %v181 = vrot.slane %v176, %v180
      %v183 = vmul.f32 %v175, %v181
      %v184 = vand.u32 2147483647, %v183
      %vm185 = vcmp.le.f32.partialorder %v184, 0.7853982
      %vm186 = vcmp.lt.s32.totalorder %v183, 0
      %v187 = vand.u32 %v183, 2139095040
      %v188 = vshrl.u32 %v187, 23
      %v189 = vsub.s32 %v188, 127
      %v190 = vand.u32 2147483647, %v183
      %v191 = vand.u32 %v190, 8388607
      %v192 = vor.u32 %v191, 8388608
      %v193 = vsub.s32 0, %v192
      %v194 = vadd.s32 %v189, 1
      %vm195 = vcmp.gt.s32.totalorder %v194, 0
      %v196 = vsel %vm195, %v194, 0
      %v197 = vshrl.u32 %v196, 5
      %v198 = vand.u32 %v196, 31
      %v199 = vsub.s32 32, %v198
      %v200 = vshrl.u32 683565275, %v199
      %v201 = vshll.u32 683565275, %v198
      %v202 = vshrl.u32 2475754826, %v199
      %v203 = vor.u32 %v201, %v202
      %v204 = vshll.u32 2475754826, %v198
      %v205 = vshrl.u32 2131351028, %v199
      %v206 = vor.u32 %v204, %v205
      %v207 = vshll.u32 2131351028, %v198
      %v208 = vshrl.u32 2102212464, %v199
      %v209 = vor.u32 %v207, %v208
      %v210 = vshll.u32 2102212464, %v198
      %v211 = vshrl.u32 920167782, %v199
      %v212 = vor.u32 %v210, %v211
      %v213 = vshll.u32 920167782, %v198
      %v214 = vshrl.u32 1326507024, %v199
      %v215 = vor.u32 %v213, %v214
      %vm216 = vcmp.lt.s32.totalorder %v197, 1
      %vm217 = vcmp.lt.s32.totalorder %v197, 2
      %vm218 = vcmp.lt.s32.totalorder %v197, 3
      %vm219 = vcmp.lt.s32.totalorder %v197, 4
      %v220 = vsel %vm216, %v200, %v203
      %v221 = vsel %vm219, %v209, 2102212464
      %v222 = vsel %vm218, %v206, %v221
      %v223 = vsel %vm217, %v220, %v222
      %v224 = vsel %vm216, %v203, %v206
      %v225 = vsel %vm219, %v212, 920167782
      %v226 = vsel %vm218, %v209, %v225
      %v227 = vsel %vm217, %v224, %v226
      %v228 = vsel %vm216, %v206, %v209
      %v229 = vsel %vm219, %v215, 1326507024
      %v230 = vsel %vm218, %v212, %v229
      %v231 = vsel %vm217, %v228, %v230
      %v232 = vshll.u32 %v192, 8
      %v233 = vmul.u32.u64.compose %v232, %v231
      %v234 = vextract.low.u32 %v233
      %v235 = vextract.high.u32 %v233
      %v236 = vmul.u32.u64.compose %v232, %v227
      %v237 = vextract.low.u32 %v236
      %v238 = vextract.high.u32 %v236
      %v239 = vmul.u32 %v232, %v223
      %v240 = vadd.s32 %v235, %v237
      %vm241 = vc.u32 %v235, %v237
      %v242 = vadd.s32 %v238, 1
      %v243 = vsel %vm241, %v242, %v238
      %v244 = vadd.s32 %v239, %v243
      %v245 = vadd.s32 %v244, 536870912
      %v246 = vshrl.u32 %v245, 30
      %v247 = vshll.u32 %v246, 30
      %v248 = vsub.s32 %v244, %v247
      %vm249 = vcmp.lt.s32.totalorder %v248, 0
      %v250 = vsub.s32 0, %v248
      %v251 = vsel %vm249, %v250, %v248
      %v252 = vclz %v251
      %v253 = vsub.s32 %v252, 2
      %vm254 = vcmp.gt.s32.totalorder 0, %v253
      %v255 = vsel %vm254, 0, %v253
      %v256 = vsub.s32 32, %v255
      %v257 = vshll.u32 %v248, %v255
      %v258 = vshrl.u32 %v240, %v256
      %v259 = vor.u32 %v257, %v258
      %v260 = vsub.s32 4294967266, %v255
      %v261 = vadd.s32 %v260, 127
      %v262 = vshll.u32 %v261, 23
      %v263 = vor.u32 4788187, %v262
      %v264 = vand.u32 2147483647, %v263
      %v266 = vcvt.s32.f32 %v259
      %v267 = vmul.f32 %v266, %v264
      %v268 = vxor.u32 %v267, 2147483648
      %v269 = vsel %vm186, %v268, %v267
      %v270 = vsub.s32 4, %v246
      %v271 = vsel %vm186, %v270, %v246
      %v272 = vsel %vm185, %v183, %v269
      %v273 = vsel %vm185, 0, %v271
      %v274 = vcosq.f32.pop %v272
      %v275 = vsinq.f32.pop %v272
      %vm276 = vweird.f32 %v183
      %v277 = vand.u32 %v273, 3
      %vm278 = vcmp.lt.s32.totalorder %v277, 2
      %vm279 = vcmp.eq.s32.totalorder %v277, 0
      %v280 = vxor.u32 %v275, 2147483648
      %v281 = vsel %vm279, %v274, %v280
      %vm282 = vcmp.eq.s32.totalorder %v277, 2
      %v283 = vxor.u32 %v274, 2147483648
      %v284 = vsel %vm282, %v283, %v275
      %v285 = vsel %vm278, %v281, %v284
      %v286 = vsel %vm276, nan, %v285
      %v287 = vand.u32 2147483647, %v183
      %vm288 = vcmp.le.f32.partialorder %v287, 0.7853982
      %vm289 = vcmp.lt.s32.totalorder %v183, 0
      %v290 = vand.u32 %v183, 2139095040
      %v291 = vshrl.u32 %v290, 23
      %v292 = vsub.s32 %v291, 127
      %v293 = vand.u32 2147483647, %v183
      %v294 = vand.u32 %v293, 8388607
      %v295 = vor.u32 %v294, 8388608
      %v296 = vsub.s32 0, %v295
      %v297 = vadd.s32 %v292, 1
      %vm298 = vcmp.gt.s32.totalorder %v297, 0
      %v299 = vsel %vm298, %v297, 0
      %v300 = vshrl.u32 %v299, 5
      %v301 = vand.u32 %v299, 31
      %v302 = vsub.s32 32, %v301
      %v303 = vshrl.u32 683565275, %v302
      %v304 = vshll.u32 683565275, %v301
      %v305 = vshrl.u32 2475754826, %v302
      %v306 = vor.u32 %v304, %v305
      %v307 = vshll.u32 2475754826, %v301
      %v308 = vshrl.u32 2131351028, %v302
      %v309 = vor.u32 %v307, %v308
      %v310 = vshll.u32 2131351028, %v301
      %v311 = vshrl.u32 2102212464, %v302
      %v312 = vor.u32 %v310, %v311
      %v313 = vshll.u32 2102212464, %v301
      %v314 = vshrl.u32 920167782, %v302
      %v315 = vor.u32 %v313, %v314
      %v316 = vshll.u32 920167782, %v301
      %v317 = vshrl.u32 1326507024, %v302
      %v318 = vor.u32 %v316, %v317
      %vm319 = vcmp.lt.s32.totalorder %v300, 1
      %vm320 = vcmp.lt.s32.totalorder %v300, 2
      %vm321 = vcmp.lt.s32.totalorder %v300, 3
      %vm322 = vcmp.lt.s32.totalorder %v300, 4
      %v323 = vsel %vm319, %v303, %v306
      %v324 = vsel %vm322, %v312, 2102212464
      %v325 = vsel %vm321, %v309, %v324
      %v326 = vsel %vm320, %v323, %v325
      %v327 = vsel %vm319, %v306, %v309
      %v328 = vsel %vm322, %v315, 920167782
      %v329 = vsel %vm321, %v312, %v328
      %v330 = vsel %vm320, %v327, %v329
      %v331 = vsel %vm319, %v309, %v312
      %v332 = vsel %vm322, %v318, 1326507024
      %v333 = vsel %vm321, %v315, %v332
      %v334 = vsel %vm320, %v331, %v333
      %v335 = vshll.u32 %v295, 8
      %v336 = vmul.u32.u64.compose %v335, %v334
      %v337 = vextract.low.u32 %v336
      %v338 = vextract.high.u32 %v336
      %v339 = vmul.u32.u64.compose %v335, %v330
      %v340 = vextract.low.u32 %v339
      %v341 = vextract.high.u32 %v339
      %v342 = vmul.u32 %v335, %v326
      %v343 = vadd.s32 %v338, %v340
      %vm344 = vc.u32 %v338, %v340
      %v345 = vadd.s32 %v341, 1
      %v346 = vsel %vm344, %v345, %v341
      %v347 = vadd.s32 %v342, %v346
      %v348 = vadd.s32 %v347, 536870912
      %v349 = vshrl.u32 %v348, 30
      %v350 = vshll.u32 %v349, 30
      %v351 = vsub.s32 %v347, %v350
      %vm352 = vcmp.lt.s32.totalorder %v351, 0
      %v353 = vsub.s32 0, %v351
      %v354 = vsel %vm352, %v353, %v351
      %v355 = vclz %v354
      %v356 = vsub.s32 %v355, 2
      %vm357 = vcmp.gt.s32.totalorder 0, %v356
      %v358 = vsel %vm357, 0, %v356
      %v359 = vsub.s32 32, %v358
      %v360 = vshll.u32 %v351, %v358
      %v361 = vshrl.u32 %v343, %v359
      %v362 = vor.u32 %v360, %v361
      %v363 = vsub.s32 4294967266, %v358
      %v364 = vadd.s32 %v363, 127
      %v365 = vshll.u32 %v364, 23
      %v366 = vor.u32 4788187, %v365
      %v367 = vand.u32 2147483647, %v366
      %v369 = vcvt.s32.f32 %v362
      %v370 = vmul.f32 %v369, %v367
      %v371 = vxor.u32 %v370, 2147483648
      %v372 = vsel %vm289, %v371, %v370
      %v373 = vsub.s32 4, %v349
      %v374 = vsel %vm289, %v373, %v349
      %v375 = vsel %vm288, %v183, %v372
      %v376 = vsel %vm288, 0, %v374
      %v377 = vcosq.f32.pop %v375
      %v378 = vsinq.f32.pop %v375
      %vm379 = vweird.f32 %v183
      %v380 = vadd.s32 %v376, 3
      %v381 = vand.u32 %v380, 3
      %vm382 = vcmp.lt.s32.totalorder %v381, 2
      %vm383 = vcmp.eq.s32.totalorder %v381, 0
      %v384 = vxor.u32 %v378, 2147483648
      %v385 = vsel %vm383, %v377, %v384
      %vm386 = vcmp.eq.s32.totalorder %v381, 2
      %v387 = vxor.u32 %v377, 2147483648
      %v388 = vsel %vm386, %v387, %v378
      %v389 = vsel %vm382, %v385, %v388
      %v390 = vsel %vm379, nan, %v389
      %391 = vst [vmem:[%s155] sm:$0xff] %v286
      %392 = vst [vmem:[%s159] sm:$0xff] %v390
      %p393 = scmp.lt.s32.totalorder %s15, 1
      %s394 = scalar_select %p393, %s15, 1
      %s395 = smul.addr %s394, 8
      %s396 = scalar_lea.vmem %s2, %s395
      %p397 = scmp.lt.s32.totalorder %s15, 1
      %s398 = scalar_select %p397, %s15, 1
      %s399 = smul.addr %s398, 8
      %s400 = scalar_lea.vmem %s3, %s399
      // Predicated region
      $region29: #{_build_cos_sin_cache_impl.1} parent=27 // pred_check
        %p401 = pneg %p75
      $region30: #{_build_cos_sin_cache_impl.1} parent=27 // pred_check_branch
        %403 = sbr.rel (%p401) target = $region32
      $region31: #{_build_cos_sin_cache_impl.1} parent=27 // pred_region
        _
      $region32: #{_build_cos_sin_cache_impl.1} parent=27 // pred_fallthru
        _
      // Predicated region
      $region33: #{_build_cos_sin_cache_impl.1} parent=27 // pred_check
        %p404 = pneg %p101
      $region34: #{_build_cos_sin_cache_impl.1} parent=27 // pred_check_branch
        %406 = sbr.rel (%p404) target = $region36
      $region35: #{_build_cos_sin_cache_impl.1} parent=27 // pred_region
        _
      $region36: #{_build_cos_sin_cache_impl.1} parent=27 // pred_fallthru
        _
    $region28: #{_build_cos_sin_cache_impl.1} parent=5 // pred_fallthru
      _
    %p407 = scmp.le.s32.totalorder 2, %s10
    // Predicated region
    $region37: #{_build_cos_sin_cache_impl.1} parent=5 // pred_check
      %p408 = pneg %p407
    $region38: #{_build_cos_sin_cache_impl.1} parent=5 // pred_check_branch
      %410 = sbr.rel (%p408) target = $region40
    $region39: #{_build_cos_sin_cache_impl.1} parent=5 // pred_region
      %s411 = ssub.s32 %s10, 2
      // Predicated region
      $region41: #{_build_cos_sin_cache_impl.1} parent=39 // pred_check
        %p412 = pneg %p81
      $region42: #{_build_cos_sin_cache_impl.1} parent=39 // pred_check_branch
        %414 = sbr.rel (%p412) target = $region44
      $region43: #{_build_cos_sin_cache_impl.1} parent=39 // pred_region
        %p415 = scmp.lt.s32.totalorder %s16, 1
        %s416 = scalar_select %p415, %s16, 1
        %s417 = smul.addr %s416, 8
        %s418 = scalar_lea.vmem %s2, %s417
      $region44: #{_build_cos_sin_cache_impl.1} parent=39 // pred_fallthru
        _
      // Predicated region
      $region45: #{_build_cos_sin_cache_impl.1} parent=39 // pred_check
        %p419 = pneg %p107
      $region46: #{_build_cos_sin_cache_impl.1} parent=39 // pred_check_branch
        %421 = sbr.rel (%p419) target = $region48
      $region47: #{_build_cos_sin_cache_impl.1} parent=39 // pred_region
        %p422 = scmp.lt.s32.totalorder %s16, 1
        %s423 = scalar_select %p422, %s16, 1
        %s424 = smul.addr %s423, 8
        %s425 = scalar_lea.vmem %s3, %s424
      $region48: #{_build_cos_sin_cache_impl.1} parent=39 // pred_fallthru
        _
    $region40: #{_build_cos_sin_cache_impl.1} parent=5 // pred_fallthru
      _
  $region6: #{_build_cos_sin_cache_impl.1} parent=0 // loop_footer
    %s14 = sadd.s32 1, %s10
  $region7: #{_build_cos_sin_cache_impl.1} parent=0 // loop_footer_branch
    %9 = sbr.rel target = $region3
  $region8: #{_build_cos_sin_cache_impl.1} parent=0 // loop_exit
    _

</llo_original>
